<compile_context>
chip_gen: v6e
topology: v6e:2x2x1
jax: 0.10.0
libtpu: 0.0.40
codegen_flags: <defaults>
</compile_context>

<pallas_src>
import math
import functools
import numpy as np

import jax
import jax.numpy as jnp
from jax import lax
from jax.experimental import pallas as pl
from jax.experimental.pallas import tpu as pltpu


def _next_pow2(n):
    return 1 << max(0, int(n - 1).bit_length())


def _bucket_len(n, lane=128):
    """Round n up to lane * next_pow2 (bounds recompiles to log-many buckets)."""
    return lane * _next_pow2(-(-n // lane))


def _choose_tiles(ns, nq):
    """Source-chunk and query-tile sizes for the interpolation kernel."""
    chunk = ns
    for c in (1024, 512, 256, 128):
        if ns % c == 0:
            chunk = c
            break
    budget = 512 * 1024            # max chunk*tq elements (~2 MiB f32 temporaries)
    tq = 128
    for t in (4096, 2048, 1024, 512, 256, 128):
        if nq % t == 0 and chunk * t <= budget:
            tq = t
            break
    return chunk, tq


# ----------------------------------------------------------------------------
# Pallas kernel 1: EQ-kernel interpolation (source-chunked, bf16 MXU path)
# ----------------------------------------------------------------------------
def _interp_kernel(xq_ref, xs_ref, vaug_ref, out_ref, acc_ref, *,
                   inv_two_l2, keep_density, eps):
    c = pl.program_id(2)

    @pl.when(c == 0)
    def _():
        acc_ref[...] = jnp.zeros_like(acc_ref)

    xq = xq_ref[...]                       # (1, TQ)       queries on lanes
    xs = xs_ref[0]                         # (CHUNK, 1)    source chunk on sublanes
    vaug = vaug_ref[0]                     # (Ca, CHUNK)   row 0 = density source

    d = xs - xq                            # (CHUNK, TQ)
    # TODO(synk): on v6e/v7x the exp itself could run in bf16 (2x EUP rate);
    #             kept f32 here so the same kernel lowers cleanly on v5e too.
    w = jnp.exp(d * d * (-inv_two_l2)).astype(jnp.bfloat16)
    acc_ref[...] += jnp.dot(vaug.astype(jnp.bfloat16), w,
                            preferred_element_type=jnp.float32)   # (Ca, TQ)

    @pl.when(c == pl.num_programs(2) - 1)
    def _():
        res = acc_ref[...]
        density = res[0:1, :]
        recip = pl.reciprocal(density + eps, approx=True)
        if keep_density:
            chan = lax.broadcasted_iota(jnp.int32, (res.shape[0], 1), 0)
            out_ref[0] = res * jnp.where(chan == 0, 1.0, recip)    # (Ca, TQ)
        else:
            out_ref[0] = res[1:, :] * recip                        # (Ca-1, TQ)


def kernel_interpolate(vals_aug, x_source, x_query, length_scale, *, keep_density):
    """EQ-kernel interpolation, channel-major output.

    vals_aug : (B, Ca, Ns)  f32, row 0 must be the density-source row
               (ones for valid sources, zeros for padded sources)
    x_source : (Bs, Ns, 1)  f32, Bs in {1, B} (shared sources use Bs=1)
    x_query  : (Bq, Nq)     f32, Bq in {1, B}, Nq % 128 == 0
    returns  : (B, Ca, Nq) if keep_density else (B, Ca-1, Nq)
    """
    B, Ca, Ns = vals_aug.shape
    Bq, Nq = x_query.shape
    Bs = x_source.shape[0]
    assert Nq % 128 == 0
    chunk, tq = _choose_tiles(Ns, Nq)
    n_qt = Nq // tq
    n_ct = Ns // chunk
    c_out = Ca if keep_density else Ca - 1

    q_map = (lambda b, q, c: (b, q)) if Bq > 1 else (lambda b, q, c: (0, q))
    s_map = (lambda b, q, c: (b, c, 0)) if Bs > 1 else (lambda b, q, c: (0, c, 0))
    v_map = lambda b, q, c: (b, 0, c)

    kern = functools.partial(
        _interp_kernel,
        inv_two_l2=float(0.5 / (float(length_scale) ** 2)),
        keep_density=keep_density,
        eps=1e-8)

    return pl.pallas_call(
        kern,
        out_shape=jax.ShapeDtypeStruct((B, c_out, Nq), jnp.float32),
        grid_spec=pltpu.PrefetchScalarGridSpec(
            num_scalar_prefetch=0,
            grid=(B, n_qt, n_ct),
            in_specs=[
                pl.BlockSpec((1, tq), q_map),            # queries (lanes)
                pl.BlockSpec((1, chunk, 1), s_map),      # source chunk (sublanes)
                pl.BlockSpec((1, Ca, chunk), v_map),     # values (+ density row)
            ],
            out_specs=pl.BlockSpec((1, c_out, tq), lambda b, q, c: (b, 0, q)),
            scratch_shapes=[pltpu.VMEM((Ca, tq), jnp.float32)],
        ),
        compiler_params=pltpu.CompilerParams(
            dimension_semantics=("parallel", "parallel", "arbitrary"),
            vmem_limit_bytes=32 * 1024 * 1024),
    )(x_query.astype(jnp.float32), x_source.astype(jnp.float32),
      vals_aug.astype(jnp.float32))


# ----------------------------------------------------------------------------
# Pallas kernel 2: fused SimpleCNN (4 conv1d layers, kernel 5, 'same', ReLU)
#   input : (B, 2, Lp)  [density, signal] on the padded grid (Lp % 128 == 0)
#   output: (B, 3, Lp)  rows = [masked-ones, mu, softplus(sigma)], padded tail
#           (lanes >= n_valid) zeroed in all rows so it feeds the decoder as-is.
# ----------------------------------------------------------------------------
def _fused_cnn_kernel(nv_ref, h_ref, w1, b1, w2, b2, w3, b3, w4, b4, out_ref, *,
                      L_pad, K):
    pad = K // 2
    n_valid = nv_ref[0]
    lane = lax.broadcasted_iota(jnp.int32, (1, L_pad), 1)
    validf = (lane < n_valid).astype(jnp.float32)        # (1, L_pad)

    def conv_layer(x, w_ref, b_ref, relu):
        # Re-zero the padded tail so zero-'same' padding at length n_valid is
        # exact; roll wrap-around lanes only ever read this (zeroed) tail
        # because the host guarantees L_pad - n_valid >= K//2.
        xb = (x * validf).astype(jnp.bfloat16)           # (Cin, L_pad)
        taps = [xb if k == pad else
                pltpu.roll(xb, shift=(pad - k) % L_pad, axis=1)
                for k in range(K)]
        xk = jnp.concatenate(taps, axis=0)               # (K*Cin, L_pad) bf16
        y = jnp.dot(w_ref[...], xk, preferred_element_type=jnp.float32)
        y = y + b_ref[...]                               # (Cout, 1) broadcast
        return jnp.maximum(y, 0.0) if relu else y

    x = h_ref[0]                                         # (Cin0, L_pad) f32
    x = conv_layer(x, w1, b1, True)
    x = conv_layer(x, w2, b2, True)
    x = conv_layer(x, w3, b3, True)
    y = conv_layer(x, w4, b4, False)                     # (2, L_pad)

    mu = y[0:1, :]
    sp = y[1:2, :]
    sigma = jnp.maximum(sp, 0.0) + jnp.log(1.0 + jnp.exp(-jnp.abs(sp)))

    # rows: [density source (masked ones), mu, softplus(sigma)]
    out_ref[0] = jnp.concatenate([validf, mu * validf, sigma * validf], axis=0)


def fused_simple_cnn(cnn_params, h, n_valid):
    """h: (B, Cin, Lp) -> (B, 3, Lp), rows [masked-ones, mu, softplus(sigma)]."""
    B, Cin, Lp = h.shape
    assert Lp % 128 == 0
    K = cnn_params[0][0].shape[-1]

    nv = jnp.asarray([n_valid], dtype=jnp.int32)
    flat_inputs = [h.astype(jnp.float32)]
    in_specs = [pl.BlockSpec((1, Cin, Lp), lambda b, nv_: (b, 0, 0))]
    for (w, b) in cnn_params:
        Cout, Cin_l, Kl = w.shape
        # (Cout, Cin, K) -> (Cout, K*Cin): matches the k-major tap stacking.
        w2 = jnp.transpose(w, (0, 2, 1)).reshape(Cout, Kl * Cin_l).astype(jnp.bfloat16)
        b2 = b.reshape(Cout, 1).astype(jnp.float32)
        flat_inputs += [w2, b2]
        in_specs += [pl.BlockSpec((Cout, Kl * Cin_l), lambda b_, nv_: (0, 0)),
                     pl.BlockSpec((Cout, 1), lambda b_, nv_: (0, 0))]

    kern = functools.partial(_fused_cnn_kernel, L_pad=Lp, K=K)
    # TODO(synk): for v7x (2 TCs) at batch < 2, add an L-chunk grid axis with
    #             K//2-lane halos so both cores get work.
    return pl.pallas_call(
        kern,
        out_shape=jax.ShapeDtypeStruct((B, 3, Lp), jnp.float32),
        grid_spec=pltpu.PrefetchScalarGridSpec(
            num_scalar_prefetch=1,
            grid=(B,),
            in_specs=in_specs,
            out_specs=pl.BlockSpec((1, 3, Lp), lambda b, nv_: (b, 0, 0)),
        ),
        compiler_params=pltpu.CompilerParams(
            dimension_semantics=("parallel",),
            vmem_limit_bytes=32 * 1024 * 1024),
    )(nv, *flat_inputs)


# ----------------------------------------------------------------------------
# SimpleCNN params (channels [in, 16, 32, 16, 2], kernel 5)
# ----------------------------------------------------------------------------
def init_simple_cnn(key, in_channels, kernel_size=5):
    channels = [in_channels, 16, 32, 16, 2]
    params = []
    for i in range(len(channels) - 1):
        cin, cout = channels[i], channels[i + 1]
        key, kw, kb = jax.random.split(key, 3)
        bound = 1.0 / math.sqrt(cin * kernel_size)   # PyTorch-style uniform init
        w = jax.random.uniform(kw, (cout, cin, kernel_size), jnp.float32,
                               -bound, bound)
        b = jax.random.uniform(kb, (cout,), jnp.float32, -bound, bound)
        params.append((w, b))
    return params


# ----------------------------------------------------------------------------
# ConvCNP forward
# ----------------------------------------------------------------------------
def conv_cnp_forward(params, x_context, y_context, x_target, y_target=None):
    unit_density = params["unit_density"]
    l_x = params["kernel_x_length_scale"]
    l_rho = params["kernel_rho_length_scale"]

    B, Nc, y_dim = y_context.shape
    _, Nt, x_dim = x_target.shape
    assert x_dim == 1, "Pallas kernels here specialize to 1-D processes"
    K = params["cnn"][0][0].shape[-1]
    pad = K // 2

    # --- grid construction (host-side glue; grid size is data dependent) ---
    xt = np.asarray(x_target[..., 0])
    x_min = float(np.min(xt))
    x_max = float(np.max(xt))
    x_range = x_max - x_min
    x_min = math.floor(x_min - 0.1 * x_range)
    x_max = math.ceil(x_max + 0.1 * x_range)
    G = max(int(unit_density * (x_max - x_min)), 1)
    Lp = _bucket_len(G + pad)                        # bucketed, lane-aligned grid
    assert Lp - G >= pad                             # slack -> no wrap masks needed
    t_lin = np.linspace(x_min, x_max, G, dtype=np.float32)
    t_full = np.empty((Lp,), dtype=np.float32)
    t_full[:G] = t_lin
    t_full[G:] = t_lin[-1]
    t_query = jnp.asarray(t_full)[None, :]           # (1, Lp)  shared across batch
    t_src = jnp.asarray(t_full)[None, :, None]       # (1, Lp, 1)

    # --- encoder: context set -> functional representation on the grid ---
    y_t = jnp.transpose(y_context.astype(jnp.float32), (0, 2, 1))   # (B, y_dim, Nc)
    ones_ctx = jnp.ones((B, 1, Nc), jnp.float32)
    v_ctx = jnp.concatenate([ones_ctx, y_t], axis=1)                # (B, y_dim+1, Nc)
    h_grid = kernel_interpolate(v_ctx, x_context.astype(jnp.float32), t_query, l_x,
                                keep_density=True)                  # (B, y_dim+1, Lp)

    # --- rho CNN on the grid (single fused kernel) ---
    # output rows: [masked-ones, mu_grid, softplus(sigma_grid)] -> decoder input
    grid_feat = fused_simple_cnn(params["cnn"], h_grid, n_valid=G)  # (B, 3, Lp)

    # --- decoder: grid -> target locations ---
    Ntp = _bucket_len(Nt)
    xq_t = x_target[..., 0].astype(jnp.float32)                     # (B, Nt)
    if Ntp > Nt:
        xq_t = jnp.pad(xq_t, ((0, 0), (0, Ntp - Nt)), mode="edge")
    y_pred = kernel_interpolate(grid_feat, t_src, xq_t, l_rho,
                                keep_density=False)                 # (B, 2, Ntp)
    y_pred = y_pred[:, :, :Nt]
    y_pred_mu = jnp.transpose(y_pred[:, 0:1, :], (0, 2, 1))         # (B, Nt, 1)
    y_pred_sigma = jnp.transpose(y_pred[:, 1:2, :], (0, 2, 1))      # (B, Nt, 1)

    if y_target is not None:
        var = y_pred_sigma ** 2
        log_prob = (-0.5 * (y_target - y_pred_mu) ** 2 / var
                    - jnp.log(y_pred_sigma)
                    - 0.5 * math.log(2.0 * math.pi))
        loss = -jnp.mean(log_prob)
    else:
        loss = None
    return y_pred_mu, y_pred_sigma, loss, None, None


# ----------------------------------------------------------------------------
if __name__ == "__main__":
    key = jax.random.PRNGKey(0)
    B, Nc, Nt = 2, 8, 16
    k1, k2, k3, k4, k5 = jax.random.split(key, 5)

    x_context = jax.random.uniform(k1, (B, Nc, 1), jnp.float32)
    y_context = jax.random.normal(k2, (B, Nc, 1), jnp.float32)
    # target set is a superset of the context set
    x_target = jnp.concatenate(
        [x_context, jax.random.uniform(k3, (B, Nt - Nc, 1), jnp.float32)], axis=1)
    y_target = jnp.concatenate(
        [y_context, jax.random.normal(k4, (B, Nt - Nc, 1), jnp.float32)], axis=1)

    unit_density = 32
    params = {
        "unit_density": unit_density,
        "kernel_x_length_scale": 2.0 / unit_density,   # nn.Parameter init value
        "kernel_rho_length_scale": 2.0 / unit_density, # nn.Parameter init value
        "cnn": init_simple_cnn(k5, in_channels=2),     # process_dimension + 1
    }

    mu, sigma, loss, _, _ = conv_cnp_forward(
        params, x_context, y_context, x_target, y_target)
    jax.block_until_ready((mu, sigma, loss))

    assert mu.shape == (B, Nt, 1), mu.shape
    assert sigma.shape == (B, Nt, 1), sigma.shape
    assert bool(jnp.all(sigma > 0.0))
    assert bool(jnp.all(jnp.isfinite(mu)))
    assert bool(jnp.isfinite(loss))
    print("KERNEL_OK")
</pallas_src>

<mosaic_0001>
module attributes {stable_mosaic.version = 11 : i64} {
  func.func @_interp_kernel(%arg0: i32, %arg1: i32, %arg2: i32, %arg3: memref<1x128xf32, #tpu.memory_space<vmem>>, %arg4: memref<1x8x1xf32, #tpu.memory_space<vmem>>, %arg5: memref<1x2x8xf32, #tpu.memory_space<vmem>>, %arg6: memref<1x2x128xf32, #tpu.memory_space<vmem>>, %arg7: memref<2x128xf32, #tpu.memory_space<vmem>>) attributes {dimension_semantics = [#tpu.dimension_semantics<parallel>, #tpu.dimension_semantics<parallel>, #tpu.dimension_semantics<arbitrary>], iteration_bounds = array<i64: 2, 1, 1>, scalar_prefetch = 0 : i64, scratch_operands = 1 : i64, tpu.core_type = #tpu.core_type<tc>, window_params = [{transform_indices = @transform_0, window_bounds = array<i64: 1, 128>}, {transform_indices = @transform_1, window_bounds = array<i64: 1, 8, 1>}, {transform_indices = @transform_2, window_bounds = array<i64: 1, 2, 8>}, {transform_indices = @transform_3, window_bounds = array<i64: 1, 2, 128>}]} {
    %c0_i32 = arith.constant 0 : i32
    %0 = arith.cmpi eq, %arg2, %c0_i32 : i32
    %1 = arith.extui %0 : i1 to i32
    %c0_i32_0 = arith.constant 0 : i32
    %2 = arith.cmpi ne, %1, %c0_i32_0 : i32
    scf.if %2 {
      %cst_15 = arith.constant 0.000000e+00 : f32
      %24 = vector.broadcast %cst_15 : f32 to vector<2x128xf32>
      %c0_16 = arith.constant 0 : index
      %c0_17 = arith.constant 0 : index
      %25 = vector.load %arg7[%c0_16, %c0_17] : memref<2x128xf32, #tpu.memory_space<vmem>>, vector<2x128xf32>
      tpu.vector_store %arg7[%c0_16, %c0_17], %24 {strides = array<i32>} : memref<2x128xf32, #tpu.memory_space<vmem>>, vector<2x128xf32>,
    } else {
    }
    %c0 = arith.constant 0 : index
    %c0_1 = arith.constant 0 : index
    %3 = vector.load %arg3[%c0, %c0_1] : memref<1x128xf32, #tpu.memory_space<vmem>>, vector<1x128xf32>
    %c0_2 = arith.constant 0 : index
    %c0_3 = arith.constant 0 : index
    %c0_4 = arith.constant 0 : index
    %4 = vector.load %arg4[%c0_2, %c0_3, %c0_4] : memref<1x8x1xf32, #tpu.memory_space<vmem>>, vector<1x8x1xf32>
    %5 = vector.shape_cast %4 : vector<1x8x1xf32> to vector<8x1xf32>
    %c0_5 = arith.constant 0 : index
    %c0_6 = arith.constant 0 : index
    %c0_7 = arith.constant 0 : index
    %6 = vector.load %arg5[%c0_5, %c0_6, %c0_7] : memref<1x2x8xf32, #tpu.memory_space<vmem>>, vector<1x2x8xf32>
    %7 = vector.shape_cast %6 : vector<1x2x8xf32> to vector<2x8xf32>
    %8 = vector.broadcast %5 : vector<8x1xf32> to vector<8x128xf32>
    %9 = vector.broadcast %3 : vector<1x128xf32> to vector<8x128xf32>
    %10 = arith.subf %8, %9 : vector<8x128xf32>
    %11 = arith.mulf %10, %10 : vector<8x128xf32>
    %cst = arith.constant -1.280000e+02 : f32
    %12 = vector.broadcast %cst : f32 to vector<8x128xf32>
    %13 = arith.mulf %11, %12 : vector<8x128xf32>
    %14 = math.exp %13 : vector<8x128xf32>
    %15 = arith.truncf %14 : vector<8x128xf32> to vector<8x128xbf16>
    %c0_8 = arith.constant 0 : index
    %c0_9 = arith.constant 0 : index
    %16 = vector.load %arg7[%c0_8, %c0_9] : memref<2x128xf32, #tpu.memory_space<vmem>>, vector<2x128xf32>
    %17 = arith.truncf %7 : vector<2x8xf32> to vector<2x8xbf16>
    %cst_10 = arith.constant dense<0.000000e+00> : vector<2x128xf32>
    %18 = tpu.matmul %17, %15, %cst_10 {dimension_numbers = #tpu.dot_dimension_numbers<[1], [0], [0], [1], [0, 0, 1, 1], [], []>} : vector<2x8xbf16>, vector<8x128xbf16>, vector<2x128xf32> -> vector<2x128xf32>
    %19 = arith.addf %16, %18 : vector<2x128xf32>
    %c0_11 = arith.constant 0 : index
    %c0_12 = arith.constant 0 : index
    %20 = vector.load %arg7[%c0_11, %c0_12] : memref<2x128xf32, #tpu.memory_space<vmem>>, vector<2x128xf32>
    tpu.vector_store %arg7[%c0_11, %c0_12], %19 {strides = array<i32>} : memref<2x128xf32, #tpu.memory_space<vmem>>, vector<2x128xf32>,
    %c0_i32_13 = arith.constant 0 : i32
    %21 = arith.cmpi eq, %arg2, %c0_i32_13 : i32
    %22 = arith.extui %21 : i1 to i32
    %c0_i32_14 = arith.constant 0 : i32
    %23 = arith.cmpi ne, %22, %c0_i32_14 : i32
    scf.if %23 {
      %c0_15 = arith.constant 0 : index
      %c0_16 = arith.constant 0 : index
      %24 = vector.load %arg7[%c0_15, %c0_16] : memref<2x128xf32, #tpu.memory_space<vmem>>, vector<2x128xf32>
      %25 = vector.extract_strided_slice %24 {offsets = [0, 0], sizes = [1, 128], strides = [1, 1]} : vector<2x128xf32> to vector<1x128xf32>
      %cst_17 = arith.constant 9.99999993E-9 : f32
      %26 = vector.broadcast %cst_17 : f32 to vector<1x128xf32>
      %27 = arith.addf %25, %26 : vector<1x128xf32>
      %28 = tpu.reciprocal %27 {approx = true} : vector<1x128xf32> -> vector<1x128xf32>
      %29 = tpu.iota {dimensions = array<i32: 0>} : vector<2x1xi32>
      %c0_i32_18 = arith.constant 0 : i32
      %30 = vector.broadcast %c0_i32_18 : i32 to vector<2x1xi32>
      %31 = arith.cmpi eq, %29, %30 : vector<2x1xi32>
      %cst_19 = arith.constant 1.000000e+00 : f32
      %32 = vector.shape_cast %31 : vector<2x1xi1> to vector<2x1xi1>
      %33 = vector.broadcast %32 : vector<2x1xi1> to vector<2x128xi1>
      %34 = vector.broadcast %cst_19 : f32 to vector<2x128xf32>
      %35 = vector.shape_cast %28 : vector<1x128xf32> to vector<1x128xf32>
      %36 = vector.broadcast %35 : vector<1x128xf32> to vector<2x128xf32>
      %37 = arith.select %33, %34, %36 : vector<2x128xi1>, vector<2x128xf32>
      %38 = arith.mulf %24, %37 : vector<2x128xf32>
      %c0_20 = arith.constant 0 : index
      %c0_21 = arith.constant 0 : index
      %c0_22 = arith.constant 0 : index
      %39 = vector.load %arg6[%c0_20, %c0_21, %c0_22] : memref<1x2x128xf32, #tpu.memory_space<vmem>>, vector<1x2x128xf32>
      %40 = vector.shape_cast %39 : vector<1x2x128xf32> to vector<2x128xf32>
      %41 = vector.shape_cast %38 : vector<2x128xf32> to vector<1x2x128xf32>
      tpu.vector_store %arg6[%c0_20, %c0_21, %c0_22], %41 {strides = array<i32>} : memref<1x2x128xf32, #tpu.memory_space<vmem>>, vector<1x2x128xf32>,
    } else {
    }
    return
  }
  func.func @transform_0(%arg0: i32, %arg1: i32, %arg2: i32) -> (i32, i32) {
    %c0_i32 = arith.constant 0 : i32
    %c0_i32_0 = arith.constant 0 : i32
    return %c0_i32, %arg1 : i32, i32
  }
  func.func @transform_1(%arg0: i32, %arg1: i32, %arg2: i32) -> (i32, i32, i32) {
    %c0_i32 = arith.constant 0 : i32
    %c0_i32_0 = arith.constant 0 : i32
    return %arg0, %arg2, %c0_i32 : i32, i32, i32
  }
  func.func @transform_2(%arg0: i32, %arg1: i32, %arg2: i32) -> (i32, i32, i32) {
    %c0_i32 = arith.constant 0 : i32
    %c0_i32_0 = arith.constant 0 : i32
    return %arg0, %c0_i32, %arg2 : i32, i32, i32
  }
  func.func @transform_3(%arg0: i32, %arg1: i32, %arg2: i32) -> (i32, i32, i32) {
    %c0_i32 = arith.constant 0 : i32
    %c0_i32_0 = arith.constant 0 : i32
    return %arg0, %c0_i32, %arg1 : i32, i32, i32
  }
}

</mosaic_0001>

<llo_original>
// kernel: tpu_custom_call.1
$region0: #{tpu_custom_call.1}
  #allocation0 [shape = 'u32[]', space=smem, size = 0x4, offset = 0x4, fixed_abs, tag = 'smem constant byte address 0x4 - core index']
  #allocation1 [shape = 'u32[144,128]{1,0:T(1,128)}', space=vmem, size = 0x12000, scoped, tag = 'internal scratch']
  #allocation2 [shape = 'f32[2,128]{1,0:T(2,128)}', space=vmem, size = 0x400, scoped, tag = 'scratch operand']
  %s0 = inlined_call_operand.vmem [shape: f32[1,128], index: 0, kind: input, shape index: {}]
  %s1 = inlined_call_operand.vmem [shape: f32[2,8,1], index: 1, kind: input, shape index: {}]
  %s2 = inlined_call_operand.vmem [shape: f32[2,2,8], index: 2, kind: input, shape index: {}]
  %s3 = inlined_call_operand.hbm [shape: f32[2,2,128], index: 3, kind: output, shape index: {}]
  %s4 = sld [smem:[#allocation0]]
  $region53: #{tpu_custom_call.1} parent=0
    _
  %s6 = ssub.s32 1, %s4
  %s7 = scalar_select 0, %s6, %s4
  $region1: #{tpu_custom_call.1} parent=0
    #allocation3 [shape = 'u8[2048]{0}', space=vmem, size = 0x800, scoped, tag = 'output window, operand 0']
    #allocation4 [shape = 's32[2]{0}', space=sflag, size = 0x8, scoped, tag = 'scoped memory for tpu_custom_call.1']
    %8 = vsyncpa [#allocation4], 0
    %s9 = scalar_lea.sflag [#allocation4], 1
    %10 = vsyncpa %s9, 0
    loop: start=0, step=1, limit=4
    $region2: #{tpu_custom_call.1} parent=1 // loop_pre_header
      _
    $region3: #{tpu_custom_call.1} parent=1 // loop_header
      %s12 = sphi 0, %s16
      %p13 = scmp.ge.s32.totalorder %s12, 4
      %s19 = sphi 0, %s38
      %s20 = sphi 0, %s34
      %s21 = sphi 0, %s30
      %s22 = sphi 0, %s19
      %s23 = sphi 0, %s20
      %s24 = sphi 0, %s21
      %s25 = sphi 0, %s22
      %s26 = sphi 0, %s23
      %s27 = sphi 0, %s24
      %s41 = sphi 0, %s43
      %s44 = sphi 0, %s41
      %s45 = sphi 0, %s44
      %s61 = sphi 0, %s45
      %s69 = sphi 0, %s71
      %s72 = sphi 0, %s69
      %s73 = sphi 0, %s72
      %s89 = sphi 0, %s73
      %s97 = sphi 0, %s99
      %s100 = sphi 0, %s97
      %s101 = sphi 0, %s100
      %s117 = sphi 0, %s101
      %s125 = sphi 0, %s127
      %s128 = sphi 0, %s125
      %s129 = sphi 0, %s128
      %s145 = sphi 0, %s129
    $region4: #{tpu_custom_call.1} parent=1 // loop_header_branch
      %15 = sbr.rel (%p13) target = $region8
    $region5: #{tpu_custom_call.1} parent=1 // loop_body
      %s17 = ssub.s32 %s12, 1
      %s18 = ssub.s32 %s12, 2
      %s28 = sadd.s32 1, %s21
      %p29 = scmp.ge.s32.totalorder %s28, 1
      %s30 = scalar_select %p29, 0, %s28
      %s31 = sadd.s32 1, %s20
      %s32 = scalar_select %p29, %s31, %s20
      %p33 = scmp.ge.s32.totalorder %s32, 1
      %s34 = scalar_select %p33, 0, %s32
      %s35 = sadd.s32 1, %s19
      %s36 = scalar_select %p33, %s35, %s19
      %p37 = scmp.ge.s32.totalorder %s36, 2
      %s38 = scalar_select %p37, 0, %s36
      %s39 = ssub.s32 %s20, %s34
      %p40 = scmp.eq.s32.totalorder %s39, 0
      %s42 = sadd.s32 %s41, 1
      %s43 = scalar_select %p40, %s41, %s42
      %p46 = pneg %p40
      %p47 = scmp.eq.s32.totalorder %s12, 1
      %p48 = por %p46, %p47
      %p49 = scmp.ne.s32.totalorder %s41, %s44
      %p50 = scmp.eq.s32.totalorder %s12, 0
      %p51 = por %p49, %p50
      %p52 = scmp.ne.s32.totalorder %s41, %s44
      %p53 = scmp.eq.s32.totalorder %s17, 1
      %p54 = por %p52, %p53
      %p55 = scmp.ne.s32.totalorder %s44, %s45
      %p56 = scmp.eq.s32.totalorder %s17, 0
      %p57 = por %p55, %p56
      %p58 = scmp.ne.s32.totalorder %s44, %s45
      %p59 = scmp.eq.s32.totalorder %s18, 1
      %p60 = por %p58, %p59
      %p62 = scmp.ne.s32.totalorder %s45, %s61
      %p63 = scmp.eq.s32.totalorder %s18, 0
      %p64 = por %p62, %p63
      %s65 = ssub.s32 %s19, %s38
      %s66 = ssub.s32 %s21, %s30
      %s67 = sor.u32 %s65, %s66
      %p68 = scmp.eq.s32.totalorder %s67, 0
      %s70 = sadd.s32 %s69, 1
      %s71 = scalar_select %p68, %s69, %s70
      %p74 = pneg %p68
      %p75 = scmp.eq.s32.totalorder %s12, 1
      %p76 = por %p74, %p75
      %p77 = scmp.ne.s32.totalorder %s69, %s72
      %p78 = scmp.eq.s32.totalorder %s12, 0
      %p79 = por %p77, %p78
      %p80 = scmp.ne.s32.totalorder %s69, %s72
      %p81 = scmp.eq.s32.totalorder %s17, 1
      %p82 = por %p80, %p81
      %p83 = scmp.ne.s32.totalorder %s72, %s73
      %p84 = scmp.eq.s32.totalorder %s17, 0
      %p85 = por %p83, %p84
      %p86 = scmp.ne.s32.totalorder %s72, %s73
      %p87 = scmp.eq.s32.totalorder %s18, 1
      %p88 = por %p86, %p87
      %p90 = scmp.ne.s32.totalorder %s73, %s89
      %p91 = scmp.eq.s32.totalorder %s18, 0
      %p92 = por %p90, %p91
      %s93 = ssub.s32 %s19, %s38
      %s94 = ssub.s32 %s21, %s30
      %s95 = sor.u32 %s93, %s94
      %p96 = scmp.eq.s32.totalorder %s95, 0
      %s98 = sadd.s32 %s97, 1
      %s99 = scalar_select %p96, %s97, %s98
      %p102 = pneg %p96
      %p103 = scmp.eq.s32.totalorder %s12, 1
      %p104 = por %p102, %p103
      %p105 = scmp.ne.s32.totalorder %s97, %s100
      %p106 = scmp.eq.s32.totalorder %s12, 0
      %p107 = por %p105, %p106
      %p108 = scmp.ne.s32.totalorder %s97, %s100
      %p109 = scmp.eq.s32.totalorder %s17, 1
      %p110 = por %p108, %p109
      %p111 = scmp.ne.s32.totalorder %s100, %s101
      %p112 = scmp.eq.s32.totalorder %s17, 0
      %p113 = por %p111, %p112
      %p114 = scmp.ne.s32.totalorder %s100, %s101
      %p115 = scmp.eq.s32.totalorder %s18, 1
      %p116 = por %p114, %p115
      %p118 = scmp.ne.s32.totalorder %s101, %s117
      %p119 = scmp.eq.s32.totalorder %s18, 0
      %p120 = por %p118, %p119
      %s121 = ssub.s32 %s19, %s38
      %s122 = ssub.s32 %s20, %s34
      %s123 = sor.u32 %s121, %s122
      %p124 = scmp.eq.s32.totalorder %s123, 0
      %s126 = sadd.s32 %s125, 1
      %s127 = scalar_select %p124, %s125, %s126
      %p130 = pneg %p124
      %p131 = scmp.eq.s32.totalorder %s12, 1
      %p132 = por %p130, %p131
      %p133 = scmp.ne.s32.totalorder %s125, %s128
      %p134 = scmp.eq.s32.totalorder %s12, 0
      %p135 = por %p133, %p134
      %p136 = scmp.ne.s32.totalorder %s125, %s128
      %p137 = scmp.eq.s32.totalorder %s17, 1
      %p138 = por %p136, %p137
      %p139 = scmp.ne.s32.totalorder %s128, %s129
      %p140 = scmp.eq.s32.totalorder %s17, 0
      %p141 = por %p139, %p140
      %p142 = scmp.ne.s32.totalorder %s128, %s129
      %p143 = scmp.eq.s32.totalorder %s18, 1
      %p144 = por %p142, %p143
      %p146 = scmp.ne.s32.totalorder %s129, %s145
      %p147 = scmp.eq.s32.totalorder %s18, 0
      %p148 = por %p146, %p147
      %p149 = scmp.le.s32.totalorder 1, %s12
      %p150 = scmp.lt.s32.totalorder %s12, 3
      %p151 = pnand %p149, %p150
      %p152 = pneg %p151
      // Predicated region
      $region9: #{tpu_custom_call.1} parent=5 // pred_check
        _
      $region10: #{tpu_custom_call.1} parent=5 // pred_check_branch
        %154 = sbr.rel (%p151) target = $region12
      $region11: #{tpu_custom_call.1} parent=5 // pred_region
        %s155 = ssub.s32 %s12, 1
        // Predicated region
        $region13: #{tpu_custom_call.1} parent=11 // pred_check
          %p156 = pneg %p57
        $region14: #{tpu_custom_call.1} parent=11 // pred_check_branch
          %158 = sbr.rel (%p156) target = $region16
        $region15: #{tpu_custom_call.1} parent=11 // pred_region
          %p159 = scmp.lt.s32.totalorder %s23, 0
          %s160 = scalar_select %p159, %s23, 0
          %s161 = scalar_lea.vmem %s0, %s160
        $region16: #{tpu_custom_call.1} parent=11 // pred_fallthru
          _
      $region12: #{tpu_custom_call.1} parent=5 // pred_fallthru
        _
      %p162 = scmp.lt.s32.totalorder %s12, 2
      // Predicated region
      $region17: #{tpu_custom_call.1} parent=5 // pred_check
        %p163 = pneg %p162
      $region18: #{tpu_custom_call.1} parent=5 // pred_check_branch
        %165 = sbr.rel (%p163) target = $region20
      $region19: #{tpu_custom_call.1} parent=5 // pred_region
        // Predicated region
        $region21: #{tpu_custom_call.1} parent=19 // pred_check
          %p166 = pneg %p79
        $region22: #{tpu_custom_call.1} parent=19 // pred_check_branch
          %168 = sbr.rel (%p166) target = $region24
        $region23: #{tpu_custom_call.1} parent=19 // pred_region
          %p169 = scmp.lt.s32.totalorder %s19, 1
          %s170 = scalar_select %p169, %s19, 1
          %p171 = scmp.lt.s32.totalorder %s21, 0
          %s172 = scalar_select %p171, %s21, 0
          %s173 = sadd.s32 %s172, %s170
          %s174 = smul.addr %s173, 8
          %s175 = scalar_lea.vmem %s1, %s174
        $region24: #{tpu_custom_call.1} parent=19 // pred_fallthru
          _
        // Predicated region
        $region25: #{tpu_custom_call.1} parent=19 // pred_check
          %p176 = pneg %p107
        $region26: #{tpu_custom_call.1} parent=19 // pred_check_branch
          %178 = sbr.rel (%p176) target = $region28
        $region27: #{tpu_custom_call.1} parent=19 // pred_region
          %p179 = scmp.lt.s32.totalorder %s19, 1
          %s180 = scalar_select %p179, %s19, 1
          %p181 = scmp.lt.s32.totalorder %s21, 0
          %s182 = scalar_select %p181, %s21, 0
          %s183 = sadd.s32 %s182, %s180
          %s184 = smul.addr %s183, 2
          %s185 = scalar_lea.vmem %s2, %s184
        $region28: #{tpu_custom_call.1} parent=19 // pred_fallthru
          _
      $region20: #{tpu_custom_call.1} parent=5 // pred_fallthru
        _
      %p186 = scmp.le.s32.totalorder 1, %s12
      %p187 = scmp.lt.s32.totalorder %s12, 3
      %p188 = pnand %p186, %p187
      %p189 = pneg %p188
      // Predicated region
      $region29: #{tpu_custom_call.1} parent=5 // pred_check
        _
      $region30: #{tpu_custom_call.1} parent=5 // pred_check_branch
        %191 = sbr.rel (%p188) target = $region32
      $region31: #{tpu_custom_call.1} parent=5 // pred_region
        %s192 = ssub.s32 %s12, 1
        %p193 = scmp.lt.s32.totalorder %s23, 0
        %s194 = scalar_select %p193, %s23, 0
        %s195 = scalar_lea.vmem %s0, %s194
        %p196 = pneg %p57
        %p197 = pneg %p54
        %p198 = scmp.lt.s32.totalorder %s22, 1
        %s199 = scalar_select %p198, %s22, 1
        %p200 = scmp.lt.s32.totalorder %s24, 0
        %s201 = scalar_select %p200, %s24, 0
        %s202 = sadd.s32 %s201, %s199
        %s203 = smul.addr %s202, 8
        %s204 = scalar_lea.vmem %s1, %s203
        %p205 = pneg %p85
        %p206 = pneg %p82
        %p207 = scmp.lt.s32.totalorder %s22, 1
        %s208 = scalar_select %p207, %s22, 1
        %p209 = scmp.lt.s32.totalorder %s24, 0
        %s210 = scalar_select %p209, %s24, 0
        %s211 = sadd.s32 %s210, %s208
        %s212 = smul.addr %s211, 2
        %s213 = scalar_lea.vmem %s2, %s212
        %p214 = pneg %p113
        %p215 = pneg %p110
        %p216 = pneg %p141
        %p217 = pneg %p138
        %s218 = sand.u32 %s128, 1
        %s219 = scalar_lea.sflag [#allocation4], %s218
        %s220 = sand.u32 %s128, 1
        %s221 = smul.addr %s220, 2
        %s222 = scalar_lea.vmem [#allocation3], %s221
        %p223 = scmp.lt.s32.totalorder %s23, 0
        %s224 = scalar_select %p223, %s23, 0
        %s225 = scalar_lea.vmem %s0, %s224
        %p226 = scmp.lt.s32.totalorder %s22, 1
        %s227 = scalar_select %p226, %s22, 1
        %p228 = scmp.lt.s32.totalorder %s24, 0
        %s229 = scalar_select %p228, %s24, 0
        %s230 = sadd.s32 %s229, %s227
        %s231 = smul.addr %s230, 8
        %s232 = scalar_lea.vmem %s1, %s231
        %p233 = scmp.lt.s32.totalorder %s22, 1
        %s234 = scalar_select %p233, %s22, 1
        %p235 = scmp.lt.s32.totalorder %s24, 0
        %s236 = scalar_select %p235, %s24, 0
        %s237 = sadd.s32 %s236, %s234
        %s238 = smul.addr %s237, 2
        %s239 = scalar_lea.vmem %s2, %s238
        %p241 = scmp.eq.s32.totalorder %s24, 0
        // Predicated region
        $region33: #{tpu_custom_call.1} parent=31 // pred_check
          %p242 = pneg %p241
        $region34: #{tpu_custom_call.1} parent=31 // pred_check_branch
          %244 = sbr.rel (%p242) target = $region36
        $region35: #{tpu_custom_call.1} parent=31 // pred_region
          %245 = vst [vmem:[#allocation2] sm:$0x3] 0.0
        $region36: #{tpu_custom_call.1} parent=31 // pred_fallthru
          _
        %v246 = vld [vmem:[%s225] sm:$0x1]
        %v247 = vld [vmem:[%s232] sm:$0xff]
        %v248 = vld [vmem:[%s239] sm:$0x3]
        %250 = vset.pattern.permute.xlu0 0
        %251 = vperm.xlu0 %250, %v247
        %v252 = vpop.permute.xlu0 %251
        %v255 = vlaneseq
        %v256 = vshrl.u32 %v255, 7
        %v257 = vsub.s32 0, %v256
        %v258 = vrot.slane %v246, %v257
        %v260 = vsub.f32 %v252, %v258
        %v261 = vmul.f32 %v260, %v260
        %v262 = vmul.f32 %v261, -128.0
        %v263 = vmul.f32 %v262, 1.442695
        %v264 = vpow.pop %v263
        %v265 = vpack.c.bf16 %v264, %v264
        %v266 = vld [vmem:[#allocation2] sm:$0x3]
        %v267 = vpack.c.bf16 %v248, %v248
        %vm268 = vcmask 64512
        %v270 = vsel %vm268, %v267, 0
        %vm272 = vcmask 1043456
        %v274 = vsel %vm272, %v265, 0
        %276 = vmatprep.subr.bf16.mxu0 0
        %277 = vmatpush1.bf16.msra.mxu0 0
        %278 = vmatprep.subr.bf16.mxu0 0
        %279 = vmatpush1.bf16.msra.mxu0 0
        %280 = vmatprep.subr.bf16.mxu0 0
        %281 = vmatpush1.bf16.msra.mxu0 0
        %282 = vmatprep.subr.bf16.mxu0 0
        %283 = vmatpush1.bf16.msra.mxu0 0
        %284 = vmatprep.subr.bf16.mxu0 0
        %285 = vmatpush1.bf16.msra.mxu0 0
        %286 = vmatprep.subr.bf16.mxu0 0
        %287 = vmatpush1.bf16.msra.mxu0 0
        %288 = vmatprep.subr.bf16.mxu0 0
        %289 = vmatpush1.bf16.msra.mxu0 0
        %290 = vmatprep.subr.bf16.mxu0 0
        %291 = vmatpush1.bf16.msra.mxu0 %v274
        %292 = vmatprep.subr.bf16.mxu0 0
        %293 = vmatpush2.bf16.msra.mxu0 0
        %294 = vmatprep.subr.bf16.mxu0 0
        %295 = vmatpush2.bf16.msra.mxu0 0
        %296 = vmatprep.subr.bf16.mxu0 0
        %297 = vmatpush2.bf16.msra.mxu0 0
        %298 = vmatprep.subr.bf16.mxu0 0
        %299 = vmatpush2.bf16.msra.mxu0 0
        %300 = vmatprep.subr.bf16.mxu0 0
        %301 = vmatpush2.bf16.msra.mxu0 0
        %302 = vmatprep.subr.bf16.mxu0 0
        %303 = vmatpush2.bf16.msra.mxu0 0
        %304 = vmatprep.subr.bf16.mxu0 0
        %305 = vmatpush2.bf16.msra.mxu0 0
        %306 = vmatprep.subr.bf16.mxu0 0
        %307 = vmatpush2.bf16.msra.mxu0 0
        %308 = vmatprep.mubr.bf16.mxu0 0
        %309 = vmatmul.mubr.bf16.gmra.mxu0 %v270
        %v310 = vpop.f32.mrf.mxu0
        %v311 = vadd.f32 0.0, %v310
        %v312 = vpop.f32.mrf.mxu0
        %v313 = vpop.f32.mrf.mxu0
        %v314 = vpop.f32.mrf.mxu0
        %315 = vdwg.mxu0
        %v316 = vadd.f32 %v266, %v311
        %317 = vst [vmem:[#allocation2] sm:$0x3] %v316
        // Predicated region
        $region37: #{tpu_custom_call.1} parent=31 // pred_check
          %p318 = pneg %p241
        $region38: #{tpu_custom_call.1} parent=31 // pred_check_branch
          %320 = sbr.rel (%p318) target = $region40
        $region39: #{tpu_custom_call.1} parent=31 // pred_region
          %v321 = vld [vmem:[#allocation2] sm:$0x3]
          %v322 = vadd.f32 %v321, 1e-08
          %v323 = vrcp.pop %v322
          %v324 = vlaneseq
          %v325 = vshrl.u32 %v324, 7
          %vm326 = vcmp.eq.s32.totalorder %v325, 0
          %v327 = vsel %vm326, 1, 0
          %vm328 = vcmp.eq.s32.totalorder %v327, 1
          %v329 = vlaneseq
          %v330 = vshrl.u32 %v329, 7
          %v331 = vsub.s32 0, %v330
          %v332 = vrot.slane %v323, %v331
          %v333 = vsel %vm328, 1.0, %v332
          %v334 = vmul.f32 %v321, %v333
          %335 = vst [vmem:[%s222] sm:$0x3] %v334
        $region40: #{tpu_custom_call.1} parent=31 // pred_fallthru
          _
        %s336 = sand.u32 %s128, 1
        %s337 = scalar_lea.sflag [#allocation4], %s336
        %s338 = sand.u32 %s128, 1
        %s339 = smul.addr %s338, 2
        %s340 = scalar_lea.vmem [#allocation3], %s339
        // Predicated region
        $region41: #{tpu_custom_call.1} parent=31 // pred_check
          %p341 = pneg %p138
        $region42: #{tpu_custom_call.1} parent=31 // pred_check_branch
          %343 = sbr.rel (%p341) target = $region44
        $region43: #{tpu_custom_call.1} parent=31 // pred_region
          %s345 = ssub.s32 32, 32
          %346 = vsyncadd %s337, %s345
          %s347 = sadd.s32 %s23, %s22
          %s348 = smul.addr %s347, 32
          %s349 = scalar_lea.hbm %s3, %s348
          %s351 = sshll.u32 %s340, 4
          %s352 = int_to_ptr.vmem [resolvable:$true] %s351
          %354 = dma.vmem_to_hbm [thread:$0]  %s352, 32, %s349, %s337
        $region44: #{tpu_custom_call.1} parent=31 // pred_fallthru
          _
      $region32: #{tpu_custom_call.1} parent=5 // pred_fallthru
        _
      %p355 = scmp.le.s32.totalorder 2, %s12
      // Predicated region
      $region45: #{tpu_custom_call.1} parent=5 // pred_check
        %p356 = pneg %p355
      $region46: #{tpu_custom_call.1} parent=5 // pred_check_branch
        %358 = sbr.rel (%p356) target = $region48
      $region47: #{tpu_custom_call.1} parent=5 // pred_region
        %s359 = ssub.s32 %s12, 2
        // Predicated region
        $region49: #{tpu_custom_call.1} parent=47 // pred_check
          %p360 = pneg %p144
        $region50: #{tpu_custom_call.1} parent=47 // pred_check_branch
          %362 = sbr.rel (%p360) target = $region52
        $region51: #{tpu_custom_call.1} parent=47 // pred_region
          %s363 = sand.u32 %s129, 1
          %s364 = scalar_lea.sflag [#allocation4], %s363
          %s365 = sand.u32 %s129, 1
          %s366 = smul.addr %s365, 2
          %s367 = scalar_lea.vmem [#allocation3], %s366
          %368 = dma.done %s364, 32
        $region52: #{tpu_custom_call.1} parent=47 // pred_fallthru
          _
      $region48: #{tpu_custom_call.1} parent=5 // pred_fallthru
        _
    $region6: #{tpu_custom_call.1} parent=1 // loop_footer
      %s16 = sadd.s32 1, %s12
    $region7: #{tpu_custom_call.1} parent=1 // loop_footer_branch
      %11 = sbr.rel target = $region3
    $region8: #{tpu_custom_call.1} parent=1 // loop_exit
      _
    %369 = vsyncpa [#allocation4], 1
    %s370 = scalar_lea.sflag [#allocation4], 1
    %371 = vsyncpa %s370, 1

</llo_original>
